<compile_context>
chip_gen: v7x
topology: tpu7x:2x2x1
jax: 0.10.0
libtpu: 0.0.40
codegen_flags: <defaults>
</compile_context>

<pallas_src>
import functools

import jax
import jax.numpy as jnp
from jax import lax
from jax.experimental import pallas as pl
from jax.experimental.pallas import tpu as pltpu

LN_EPS = 1e-12


def _round_up(x, m):
    return ((x + m - 1) // m) * m


def _electra_head_kernel(x_ref, wt_ref, bt_ref, lnw_ref, lnb_ref,
                         wd_ref, bv_ref, o_ref, t_scratch):
    """Grid: (row tile i [parallel], vocab tile j [arbitrary, innermost]).

    For each row tile the transform + gelu + layernorm result is computed
    once (j == 0, f32 math) and cached as bf16 in VMEM scratch, then reused
    for every vocab tile of the big E -> V projection.
    """
    @pl.when(pl.program_id(1) == 0)
    def _():
        # transform: Linear(H -> E); bf16 MXU operands, f32 accumulation.
        xb = x_ref[...].astype(wt_ref.dtype)
        h = jnp.dot(xb, wt_ref[...],
                    preferred_element_type=jnp.float32) + bt_ref[...]
        # gelu(x) = x * 0.5 * (1 + erf(x / 1.41421))  (matches the PyTorch code)
        h = h * 0.5 * (1.0 + lax.erf(h / 1.41421))
        # BertLayerNorm over the embedding dim, eps = 1e-12 (kept in f32).
        u = jnp.mean(h, axis=-1, keepdims=True)
        s = jnp.mean((h - u) ** 2, axis=-1, keepdims=True)
        h = (h - u) * lax.rsqrt(s + LN_EPS)            # rsqrt -> EUP slot
        t_scratch[...] = (lnw_ref[...] * h + lnb_ref[...]).astype(t_scratch.dtype)

    # dense: Linear(E -> V, no weight bias) + output bias, per vocab tile.
    out = jnp.dot(t_scratch[...], wd_ref[...],
                  preferred_element_type=jnp.float32) + bv_ref[...]
    o_ref[...] = out.astype(o_ref.dtype)


def make_params(key, hidden_size, embedding_size, vocab_size):
    """Deterministic init matching the PyTorch module's __init__:
       Linear weights ~ N(0, 0.02), linear biases = 0,
       LayerNorm weight = 1, bias = 0, output bias = 0."""
    k1, k2 = jax.random.split(key)
    return {
        "transform_w": (0.02 * jax.random.normal(
            k1, (hidden_size, embedding_size))).astype(jnp.float32),
        "transform_b": jnp.zeros((1, embedding_size), jnp.float32),
        "ln_w": jnp.ones((1, embedding_size), jnp.float32),
        "ln_b": jnp.zeros((1, embedding_size), jnp.float32),
        "dense_w": (0.02 * jax.random.normal(
            k2, (embedding_size, vocab_size))).astype(jnp.float32),
        "out_bias": jnp.zeros((1, vocab_size), jnp.float32),
    }


def prepare_params(params, vocab_tile=1024, compute_dtype=jnp.bfloat16):
    """One-time parameter prep (call OUTSIDE the jitted forward):
       * pad dense_w / out_bias vocab dim to a multiple of vocab_tile
         (lane-dense output tiles, arbitrary vocab sizes like 30522),
       * cast the two matmul weights to bf16 for the MXU.
    Returns (prepared_params, true_vocab_size)."""
    V = params["dense_w"].shape[1]
    V_pad = _round_up(V, vocab_tile)
    w_d = params["dense_w"]
    bias = params["out_bias"]
    if V_pad != V:
        w_d = jnp.pad(w_d, ((0, 0), (0, V_pad - V)))
        bias = jnp.pad(bias, ((0, 0), (0, V_pad - V)))
    prepared = {
        "transform_w": params["transform_w"].astype(compute_dtype),
        "transform_b": params["transform_b"].astype(jnp.float32),
        "ln_w": params["ln_w"].astype(jnp.float32),
        "ln_b": params["ln_b"].astype(jnp.float32),
        "dense_w": w_d.astype(compute_dtype),
        "out_bias": bias.astype(jnp.float32),
    }
    return prepared, V


@functools.partial(
    jax.jit, static_argnames=("vocab_size", "row_tile", "vocab_tile", "out_dtype"))
def electra_generator_prediction_heads(hidden_states, params, vocab_size,
                                       row_tile=512, vocab_tile=1024,
                                       out_dtype=None):
    """hidden_states: [B, S, H] float32; params from prepare_params().
    Returns logits [B, S, vocab_size]."""
    w_t = params["transform_w"]       # [H, E]     bf16
    b_t = params["transform_b"]       # [1, E]     f32
    ln_w = params["ln_w"]             # [1, E]     f32
    ln_b = params["ln_b"]             # [1, E]     f32
    w_d = params["dense_w"]           # [E, V_pad] bf16
    bias = params["out_bias"]         # [1, V_pad] f32

    compute_dtype = w_t.dtype
    # TODO(synk): flip the default to bf16 logits once downstream (argmax /
    # softmax-CE) tolerance is verified; halves the M*V writeback.
    out_dtype = hidden_states.dtype if out_dtype is None else out_dtype

    B, S, H = hidden_states.shape
    E = w_t.shape[1]
    V_pad = w_d.shape[1]
    M = B * S
    x = hidden_states.reshape(M, H)

    # --- row tiles (multiple of 8 sublanes) --------------------------------
    tm = max(8, (min(row_tile, _round_up(M, 8)) // 8) * 8)
    M_pad = _round_up(M, tm)
    # Keep >= 2 row tiles when possible so both v7x TensorCores get work on
    # the "parallel" row axis (halved tile stays a multiple of 16).
    if M_pad // tm < 2 and tm >= 32:
        tm = tm // 2
        M_pad = _round_up(M, tm)
    if M_pad != M:
        x = jnp.pad(x, ((0, M_pad - M), (0, 0)))

    # --- vocab tiles: params were pre-padded to a multiple of vocab_tile ---
    tn = min(vocab_tile, V_pad)
    assert V_pad % tn == 0, "params must be prepared with the same vocab_tile"

    grid = (M_pad // tm, V_pad // tn)
    n_row_tiles = grid[0]

    in_b = jnp.dtype(compute_dtype).itemsize
    x_b = jnp.dtype(x.dtype).itemsize
    out_b = jnp.dtype(out_dtype).itemsize

    # Honest HBM accounting: the dense weight (and its bias) are re-streamed
    # once per row tile; x and the small transform params stream once.
    cost = pl.CostEstimate(
        flops=2 * M_pad * H * E + 2 * M_pad * E * V_pad,
        transcendentals=M_pad * E,
        bytes_accessed=(M_pad * H * x_b + H * E * in_b + 4 * E * 4
                        + n_row_tiles * (E * V_pad * in_b + V_pad * 4)
                        + M_pad * V_pad * out_b),
    )

    # Double-buffered tile footprint + scratch, clamped under v7x's 64 MiB.
    vmem_est = (2 * (tm * H * x_b + H * E * in_b + 4 * E * 4
                     + E * tn * in_b + tn * 4 + tm * tn * out_b)
                + tm * E * in_b)
    vmem_limit = int(min(max(vmem_est + (8 << 20), 32 << 20), 56 << 20))

    out = pl.pallas_call(
        _electra_head_kernel,
        out_shape=jax.ShapeDtypeStruct((M_pad, V_pad), out_dtype),
        grid_spec=pltpu.PrefetchScalarGridSpec(
            num_scalar_prefetch=0,
            grid=grid,
            in_specs=[
                pl.BlockSpec((tm, H), lambda i, j: (i, 0)),   # x row tile (f32)
                # TODO(synk): mark the 4 loop-invariant specs below with
                # pipeline_mode=pl.Buffered(1) once single-buffering is
                # verified on the target jaxlib (frees ~half their VMEM).
                pl.BlockSpec((H, E), lambda i, j: (0, 0)),    # transform weight (bf16)
                pl.BlockSpec((1, E), lambda i, j: (0, 0)),    # transform bias
                pl.BlockSpec((1, E), lambda i, j: (0, 0)),    # layernorm weight
                pl.BlockSpec((1, E), lambda i, j: (0, 0)),    # layernorm bias
                pl.BlockSpec((E, tn), lambda i, j: (0, j)),   # dense weight tile (bf16)
                pl.BlockSpec((1, tn), lambda i, j: (0, j)),   # output bias tile
            ],
            out_specs=pl.BlockSpec((tm, tn), lambda i, j: (i, j)),
            scratch_shapes=[pltpu.VMEM((tm, E), compute_dtype)],
        ),
        compiler_params=pltpu.CompilerParams(
            # Row axis parallel (megacore on v7x); vocab axis must stay
            # arbitrary/innermost so the j==0 scratch init is sequential.
            dimension_semantics=("parallel", "arbitrary"),
            vmem_limit_bytes=vmem_limit),
        cost_estimate=cost,
    )(x, w_t, b_t, ln_w, ln_b, w_d, bias)

    return out[:M, :vocab_size].reshape(B, S, vocab_size)


def _reference(hidden_states, params):
    """Pure-JAX f32 reference for correctness checking."""
    h = hidden_states @ params["transform_w"] + params["transform_b"][0]
    h = h * 0.5 * (1.0 + lax.erf(h / 1.41421))
    u = jnp.mean(h, axis=-1, keepdims=True)
    s = jnp.mean((h - u) ** 2, axis=-1, keepdims=True)
    h = (h - u) / jnp.sqrt(s + LN_EPS)
    h = params["ln_w"][0] * h + params["ln_b"][0]
    return h @ params["dense_w"] + params["out_bias"][0]


if __name__ == "__main__":
    # small config consistent with the module
    batch, seq = 2, 8
    hidden_size, embedding_size, vocab_size = 32, 32, 256

    key = jax.random.PRNGKey(0)
    kx, kp = jax.random.split(key)
    hidden_states = jax.random.normal(
        kx, (batch, seq, hidden_size), dtype=jnp.float32)
    params = make_params(kp, hidden_size, embedding_size, vocab_size)

    prepared, true_vocab = prepare_params(params, vocab_tile=1024)
    out = electra_generator_prediction_heads(hidden_states, prepared, true_vocab)
    out = jax.block_until_ready(out)

    ref = _reference(hidden_states, params)
    assert out.shape == (batch, seq, vocab_size)
    max_err = float(jnp.max(jnp.abs(out - ref)))
    # bf16 MXU operands with f32 accumulation -> loosen vs. the f32 reference.
    assert jnp.allclose(out, ref, atol=2e-2, rtol=2e-2), max_err

    print("KERNEL_OK")
</pallas_src>

<mosaic_0001>
module attributes {stable_mosaic.version = 11 : i64} {
  func.func @_electra_head_kernel(%arg0: i32, %arg1: i32, %arg2: memref<16x32xf32, #tpu.memory_space<vmem>>, %arg3: memref<32x32xbf16, #tpu.memory_space<vmem>>, %arg4: memref<1x32xf32, #tpu.memory_space<vmem>>, %arg5: memref<1x32xf32, #tpu.memory_space<vmem>>, %arg6: memref<1x32xf32, #tpu.memory_space<vmem>>, %arg7: memref<32x1024xbf16, #tpu.memory_space<vmem>>, %arg8: memref<1x1024xf32, #tpu.memory_space<vmem>>, %arg9: memref<16x1024xf32, #tpu.memory_space<vmem>>, %arg10: memref<16x32xbf16, #tpu.memory_space<vmem>>) attributes {dimension_semantics = [#tpu.dimension_semantics<parallel>, #tpu.dimension_semantics<arbitrary>], iteration_bounds = array<i64: 1, 1>, scalar_prefetch = 0 : i64, scratch_operands = 1 : i64, tpu.core_type = #tpu.core_type<tc>, window_params = [{transform_indices = @transform_0, window_bounds = array<i64: 16, 32>}, {pipeline_mode = #tpu.pipeline_mode<synchronous>, transform_indices = @transform_1, window_bounds = array<i64: 32, 32>}, {pipeline_mode = #tpu.pipeline_mode<synchronous>, transform_indices = @transform_2, window_bounds = array<i64: 1, 32>}, {pipeline_mode = #tpu.pipeline_mode<synchronous>, transform_indices = @transform_3, window_bounds = array<i64: 1, 32>}, {pipeline_mode = #tpu.pipeline_mode<synchronous>, transform_indices = @transform_4, window_bounds = array<i64: 1, 32>}, {transform_indices = @transform_5, window_bounds = array<i64: 32, 1024>}, {transform_indices = @transform_6, window_bounds = array<i64: 1, 1024>}, {transform_indices = @transform_7, window_bounds = array<i64: 16, 1024>}]} {
    %c0_i32 = arith.constant 0 : i32
    %0 = arith.cmpi eq, %arg1, %c0_i32 : i32
    %1 = arith.extui %0 : i1 to i32
    %c0_i32_0 = arith.constant 0 : i32
    %2 = arith.cmpi ne, %1, %c0_i32_0 : i32
    scf.if %2 {
      %c0_8 = arith.constant 0 : index
      %c0_9 = arith.constant 0 : index
      %10 = vector.load %arg2[%c0_8, %c0_9] : memref<16x32xf32, #tpu.memory_space<vmem>>, vector<16x32xf32>
      %11 = arith.truncf %10 : vector<16x32xf32> to vector<16x32xbf16>
      %c0_10 = arith.constant 0 : index
      %c0_11 = arith.constant 0 : index
      %12 = vector.load %arg3[%c0_10, %c0_11] : memref<32x32xbf16, #tpu.memory_space<vmem>>, vector<32x32xbf16>
      %cst_12 = arith.constant dense<0.000000e+00> : vector<16x32xf32>
      %13 = tpu.matmul %11, %12, %cst_12 {dimension_numbers = #tpu.dot_dimension_numbers<[1], [0], [0], [1], [0, 0, 1, 1], [], []>} : vector<16x32xbf16>, vector<32x32xbf16>, vector<16x32xf32> -> vector<16x32xf32>
      %c0_13 = arith.constant 0 : index
      %c0_14 = arith.constant 0 : index
      %14 = vector.load %arg4[%c0_13, %c0_14] : memref<1x32xf32, #tpu.memory_space<vmem>>, vector<1x32xf32>
      %15 = vector.broadcast %14 : vector<1x32xf32> to vector<16x32xf32>
      %16 = arith.addf %13, %15 : vector<16x32xf32>
      %cst_15 = arith.constant 5.000000e-01 : f32
      %17 = vector.broadcast %cst_15 : f32 to vector<16x32xf32>
      %18 = arith.mulf %16, %17 : vector<16x32xf32>
      %cst_16 = arith.constant 1.414210e+00 : f32
      %19 = vector.broadcast %cst_16 : f32 to vector<16x32xf32>
      %20 = arith.divf %16, %19 : vector<16x32xf32>
      %21 = math.erf %20 : vector<16x32xf32>
      %cst_17 = arith.constant 1.000000e+00 : f32
      %22 = vector.broadcast %cst_17 : f32 to vector<16x32xf32>
      %23 = arith.addf %22, %21 : vector<16x32xf32>
      %24 = arith.mulf %18, %23 : vector<16x32xf32>
      %cst_18 = arith.constant dense<0.000000e+00> : vector<16xf32>
      %25 = vector.multi_reduction <add>, %24, %cst_18 [1] : vector<16x32xf32> to vector<16xf32>
      %26 = vector.shape_cast %25 : vector<16xf32> to vector<16x1xf32>
      %cst_19 = arith.constant 3.200000e+01 : f32
      %27 = vector.broadcast %cst_19 : f32 to vector<16x1xf32>
      %28 = arith.divf %26, %27 : vector<16x1xf32>
      %29 = vector.broadcast %28 : vector<16x1xf32> to vector<16x32xf32>
      %30 = arith.subf %24, %29 : vector<16x32xf32>
      %31 = arith.mulf %30, %30 : vector<16x32xf32>
      %cst_20 = arith.constant dense<0.000000e+00> : vector<16xf32>
      %32 = vector.multi_reduction <add>, %31, %cst_20 [1] : vector<16x32xf32> to vector<16xf32>
      %33 = vector.shape_cast %32 : vector<16xf32> to vector<16x1xf32>
      %cst_21 = arith.constant 3.200000e+01 : f32
      %34 = vector.broadcast %cst_21 : f32 to vector<16x1xf32>
      %35 = arith.divf %33, %34 : vector<16x1xf32>
      %36 = vector.broadcast %28 : vector<16x1xf32> to vector<16x32xf32>
      %37 = arith.subf %24, %36 : vector<16x32xf32>
      %cst_22 = arith.constant 9.99999996E-13 : f32
      %38 = vector.broadcast %cst_22 : f32 to vector<16x1xf32>
      %39 = arith.addf %35, %38 : vector<16x1xf32>
      %40 = math.rsqrt %39 : vector<16x1xf32>
      %41 = vector.broadcast %40 : vector<16x1xf32> to vector<16x32xf32>
      %42 = arith.mulf %37, %41 : vector<16x32xf32>
      %c0_23 = arith.constant 0 : index
      %c0_24 = arith.constant 0 : index
      %43 = vector.load %arg5[%c0_23, %c0_24] : memref<1x32xf32, #tpu.memory_space<vmem>>, vector<1x32xf32>
      %44 = vector.broadcast %43 : vector<1x32xf32> to vector<16x32xf32>
      %45 = arith.mulf %44, %42 : vector<16x32xf32>
      %c0_25 = arith.constant 0 : index
      %c0_26 = arith.constant 0 : index
      %46 = vector.load %arg6[%c0_25, %c0_26] : memref<1x32xf32, #tpu.memory_space<vmem>>, vector<1x32xf32>
      %47 = vector.broadcast %46 : vector<1x32xf32> to vector<16x32xf32>
      %48 = arith.addf %45, %47 : vector<16x32xf32>
      %49 = arith.truncf %48 : vector<16x32xf32> to vector<16x32xbf16>
      %c0_27 = arith.constant 0 : index
      %c0_28 = arith.constant 0 : index
      %50 = vector.load %arg10[%c0_27, %c0_28] : memref<16x32xbf16, #tpu.memory_space<vmem>>, vector<16x32xbf16>
      tpu.vector_store %arg10[%c0_27, %c0_28], %49 {strides = array<i32>} : memref<16x32xbf16, #tpu.memory_space<vmem>>, vector<16x32xbf16>,
    } else {
    }
    %c0 = arith.constant 0 : index
    %c0_1 = arith.constant 0 : index
    %3 = vector.load %arg10[%c0, %c0_1] : memref<16x32xbf16, #tpu.memory_space<vmem>>, vector<16x32xbf16>
    %c0_2 = arith.constant 0 : index
    %c0_3 = arith.constant 0 : index
    %4 = vector.load %arg7[%c0_2, %c0_3] : memref<32x1024xbf16, #tpu.memory_space<vmem>>, vector<32x1024xbf16>
    %cst = arith.constant dense<0.000000e+00> : vector<16x1024xf32>
    %5 = tpu.matmul %3, %4, %cst {dimension_numbers = #tpu.dot_dimension_numbers<[1], [0], [0], [1], [0, 0, 1, 1], [], []>} : vector<16x32xbf16>, vector<32x1024xbf16>, vector<16x1024xf32> -> vector<16x1024xf32>
    %c0_4 = arith.constant 0 : index
    %c0_5 = arith.constant 0 : index
    %6 = vector.load %arg8[%c0_4, %c0_5] : memref<1x1024xf32, #tpu.memory_space<vmem>>, vector<1x1024xf32>
    %7 = vector.broadcast %6 : vector<1x1024xf32> to vector<16x1024xf32>
    %8 = arith.addf %5, %7 : vector<16x1024xf32>
    %c0_6 = arith.constant 0 : index
    %c0_7 = arith.constant 0 : index
    %9 = vector.load %arg9[%c0_6, %c0_7] : memref<16x1024xf32, #tpu.memory_space<vmem>>, vector<16x1024xf32>
    tpu.vector_store %arg9[%c0_6, %c0_7], %8 {strides = array<i32>} : memref<16x1024xf32, #tpu.memory_space<vmem>>, vector<16x1024xf32>,
    return
  }
  func.func @transform_0(%arg0: i32, %arg1: i32) -> (i32, i32) {
    %c0_i32 = arith.constant 0 : i32
    %c0_i32_0 = arith.constant 0 : i32
    return %arg0, %c0_i32 : i32, i32
  }
  func.func @transform_1(%arg0: i32, %arg1: i32) -> (i32, i32) {
    %c0_i32 = arith.constant 0 : i32
    %c0_i32_0 = arith.constant 0 : i32
    %c0_i32_1 = arith.constant 0 : i32
    return %c0_i32, %c0_i32_0 : i32, i32
  }
  func.func @transform_2(%arg0: i32, %arg1: i32) -> (i32, i32) {
    %c0_i32 = arith.constant 0 : i32
    %c0_i32_0 = arith.constant 0 : i32
    %c0_i32_1 = arith.constant 0 : i32
    return %c0_i32, %c0_i32_0 : i32, i32
  }
  func.func @transform_3(%arg0: i32, %arg1: i32) -> (i32, i32) {
    %c0_i32 = arith.constant 0 : i32
    %c0_i32_0 = arith.constant 0 : i32
    %c0_i32_1 = arith.constant 0 : i32
    return %c0_i32, %c0_i32_0 : i32, i32
  }
  func.func @transform_4(%arg0: i32, %arg1: i32) -> (i32, i32) {
    %c0_i32 = arith.constant 0 : i32
    %c0_i32_0 = arith.constant 0 : i32
    %c0_i32_1 = arith.constant 0 : i32
    return %c0_i32, %c0_i32_0 : i32, i32
  }
  func.func @transform_5(%arg0: i32, %arg1: i32) -> (i32, i32) {
    %c0_i32 = arith.constant 0 : i32
    %c0_i32_0 = arith.constant 0 : i32
    return %c0_i32, %arg1 : i32, i32
  }
  func.func @transform_6(%arg0: i32, %arg1: i32) -> (i32, i32) {
    %c0_i32 = arith.constant 0 : i32
    %c0_i32_0 = arith.constant 0 : i32
    return %c0_i32, %arg1 : i32, i32
  }
  func.func @transform_7(%arg0: i32, %arg1: i32) -> (i32, i32) {
    %c0_i32 = arith.constant 0 : i32
    return %arg0, %arg1 : i32, i32
  }
}

</mosaic_0001>

<llo_original>
// kernel: electra_generator_prediction_heads.1
$region0: #{electra_generator_prediction_heads.1}
  #allocation0 [shape = 'u32[]', space=smem, size = 0x4, offset = 0x4, fixed_abs, tag = 'smem constant byte address 0x4 - core index']
  #allocation1 [shape = 'u32[144,128]{1,0:T(1,128)}', space=vmem, size = 0x12000, scoped, tag = 'internal scratch']
  #allocation2 [shape = 'bf16[16,32]{1,0:T(16,128)(2,1)}', space=vmem, size = 0x1000, scoped, tag = 'scratch operand']
  %s0 = inlined_call_operand.hbm [shape: f32[16,32], index: 0, kind: input, shape index: {}]
  %s1 = inlined_call_operand.vmem [shape: bf16[32,32], index: 1, kind: input, shape index: {}]
  %s2 = inlined_call_operand.vmem [shape: f32[1,32], index: 2, kind: input, shape index: {}]
  %s3 = inlined_call_operand.vmem [shape: f32[1,32], index: 3, kind: input, shape index: {}]
  %s4 = inlined_call_operand.hbm [shape: f32[1,32], index: 4, kind: input, shape index: {}]
  %s5 = inlined_call_operand.hbm [shape: bf16[32,1024], index: 5, kind: input, shape index: {}]
  %s6 = inlined_call_operand.vmem [shape: f32[1,1024], index: 6, kind: input, shape index: {}]
  %s7 = inlined_call_operand.vmem [shape: f32[16,1024], index: 7, kind: output, shape index: {}]
  %s8 = sld [smem:[#allocation0]]
  $region54: #{electra_generator_prediction_heads.1} parent=0
    _
  %s10 = ssub.s32 1, %s8
  %s11 = scalar_select 0, %s10, %s8
  $region1: #{electra_generator_prediction_heads.1} parent=0
    #allocation3 [shape = 'u8[8192]{0}', space=vmem, size = 0x2000, scoped, tag = 'input window, operand 0, single buffered']
    #allocation4 [shape = 's32[1]{0}', space=sflag, size = 0x4, scoped, tag = 'scoped memory for electra_generator_prediction_heads.1']
    #allocation5 [shape = 'u8[512]{0}', space=vmem, size = 0x400, scoped, tag = 'input window, operand 4, single buffered']
    #allocation6 [shape = 's32[1]{0}', space=sflag, size = 0x4, scoped, tag = 'scoped memory for electra_generator_prediction_heads.1']
    #allocation7 [shape = 'u8[65536]{0}', space=vmem, size = 0x10000, scoped, tag = 'input window, operand 5, single buffered']
    %12 = vsyncpa [#allocation4], 0
    %13 = vsyncpa [#allocation6], 0
    // Predicated region
    $region2: #{electra_generator_prediction_heads.1} parent=1 // pred_check
      _
    $region3: #{electra_generator_prediction_heads.1} parent=1 // pred_check_branch
      %15 = sbr.rel (0) target = $region5
    $region4: #{electra_generator_prediction_heads.1} parent=1 // pred_region
      %s17 = ssub.s32 256, 256
      %18 = vsyncadd [#allocation4], %s17
      %s19 = sshll.u32 [#allocation3], 4
      %s20 = int_to_ptr.vmem [resolvable:$true] %s19
      %25 = dma.hbm_to_vmem [thread:$0]  %s0, 256, %s20, [#allocation4], 128, 128, 8
    $region5: #{electra_generator_prediction_heads.1} parent=1 // pred_fallthru
      _
    // Predicated region
    $region6: #{electra_generator_prediction_heads.1} parent=1 // pred_check
      _
    $region7: #{electra_generator_prediction_heads.1} parent=1 // pred_check_branch
      %27 = sbr.rel (0) target = $region9
    $region8: #{electra_generator_prediction_heads.1} parent=1 // pred_region
      _
    $region9: #{electra_generator_prediction_heads.1} parent=1 // pred_fallthru
      _
    // Predicated region
    $region10: #{electra_generator_prediction_heads.1} parent=1 // pred_check
      _
    $region11: #{electra_generator_prediction_heads.1} parent=1 // pred_check_branch
      %29 = sbr.rel (0) target = $region13
    $region12: #{electra_generator_prediction_heads.1} parent=1 // pred_region
      _
    $region13: #{electra_generator_prediction_heads.1} parent=1 // pred_fallthru
      _
    // Predicated region
    $region14: #{electra_generator_prediction_heads.1} parent=1 // pred_check
      _
    $region15: #{electra_generator_prediction_heads.1} parent=1 // pred_check_branch
      %31 = sbr.rel (0) target = $region17
    $region16: #{electra_generator_prediction_heads.1} parent=1 // pred_region
      _
    $region17: #{electra_generator_prediction_heads.1} parent=1 // pred_fallthru
      _
    // Predicated region
    $region18: #{electra_generator_prediction_heads.1} parent=1 // pred_check
      _
    $region19: #{electra_generator_prediction_heads.1} parent=1 // pred_check_branch
      %33 = sbr.rel (0) target = $region21
    $region20: #{electra_generator_prediction_heads.1} parent=1 // pred_region
      %s35 = ssub.s32 16, 16
      %36 = vsyncadd [#allocation6], %s35
      %s38 = sshll.u32 [#allocation5], 4
      %s39 = int_to_ptr.vmem [resolvable:$true] %s38
      %41 = dma.hbm_to_vmem [thread:$0]  %s4, 16, %s39, [#allocation6]
    $region21: #{electra_generator_prediction_heads.1} parent=1 // pred_fallthru
      _
    // Predicated region
    $region22: #{electra_generator_prediction_heads.1} parent=1 // pred_check
      _
    $region23: #{electra_generator_prediction_heads.1} parent=1 // pred_check_branch
      %43 = sbr.rel (0) target = $region25
    $region24: #{electra_generator_prediction_heads.1} parent=1 // pred_region
      %s45 = ssub.s32 2048, 2048
      %46 = vsyncadd [#allocation6], %s45
      %s47 = sshll.u32 [#allocation7], 4
      %s48 = int_to_ptr.vmem [resolvable:$true] %s47
      %53 = dma.hbm_to_vmem [thread:$0]  %s5, 2048, %s48, [#allocation6], 512, 512, 32
    $region25: #{electra_generator_prediction_heads.1} parent=1 // pred_fallthru
      _
    // Predicated region
    $region26: #{electra_generator_prediction_heads.1} parent=1 // pred_check
      _
    $region27: #{electra_generator_prediction_heads.1} parent=1 // pred_check_branch
      %55 = sbr.rel (0) target = $region29
    $region28: #{electra_generator_prediction_heads.1} parent=1 // pred_region
      _
    $region29: #{electra_generator_prediction_heads.1} parent=1 // pred_fallthru
      _
    // Predicated region
    $region30: #{electra_generator_prediction_heads.1} parent=1 // pred_check
      _
    $region31: #{electra_generator_prediction_heads.1} parent=1 // pred_check_branch
      %57 = sbr.rel (0) target = $region33
    $region32: #{electra_generator_prediction_heads.1} parent=1 // pred_region
      %58 = dma.done [#allocation4], 256
    $region33: #{electra_generator_prediction_heads.1} parent=1 // pred_fallthru
      _
    // Predicated region
    $region34: #{electra_generator_prediction_heads.1} parent=1 // pred_check
      _
    $region35: #{electra_generator_prediction_heads.1} parent=1 // pred_check_branch
      %60 = sbr.rel (0) target = $region37
    $region36: #{electra_generator_prediction_heads.1} parent=1 // pred_region
      %61 = dma.done [#allocation6], 16
    $region37: #{electra_generator_prediction_heads.1} parent=1 // pred_fallthru
      _
    // Predicated region
    $region38: #{electra_generator_prediction_heads.1} parent=1 // pred_check
      _
    $region39: #{electra_generator_prediction_heads.1} parent=1 // pred_check_branch
      %63 = sbr.rel (0) target = $region41
    $region40: #{electra_generator_prediction_heads.1} parent=1 // pred_region
      %64 = dma.done [#allocation6], 2048
    $region41: #{electra_generator_prediction_heads.1} parent=1 // pred_fallthru
      _
    %p66 = scmp.eq.s32.totalorder 0, 0
    // Predicated region
    $region42: #{electra_generator_prediction_heads.1} parent=1 // pred_check
      %p67 = pneg %p66
    $region43: #{electra_generator_prediction_heads.1} parent=1 // pred_check_branch
      %69 = sbr.rel (%p67) target = $region45
    $region44: #{electra_generator_prediction_heads.1} parent=1 // pred_region
      %v70 = vld [vmem:[#allocation3] sm:$0xff]
      %v71 = vld [vmem:[#allocation3 + $0x8] sm:$0xff]
      %v72 = vpack.c.bf16 %v71, %v70
      %v73 = vld [vmem:[%s1] sm:$0xf]
      %v74 = vld [vmem:[%s1 + $0x4] sm:$0xf]
      %v75 = vld [vmem:[%s1 + $0x8] sm:$0xf]
      %v76 = vld [vmem:[%s1 + $0xc] sm:$0xf]
      %v77 = vld [vmem:[%s2] sm:$0x1]
      %v79 = vlaneseq
      %v80 = vshrl.u32 %v79, 7
      %v81 = vsub.s32 0, %v80
      %v82 = vrot.slane %v77, %v81
      %v88 = vunpack.c.l.b16 %v73
      %v89 = vunpack.c.l.b16 %v74
      %v90 = vunpack.c.l.b16 %v75
      %v91 = vunpack.c.l.b16 %v76
      %v92 = vpack.c.b16 %v89, %v88
      %v93 = vpack.c.b16 %v91, %v90
      %vm96 = vcmask 261120
      %v98 = vsel %vm96, %v72, 0
      %100 = vmatprep.subr.bf16.mxu0 0
      %101 = vmatpush1.bf16.msra.mxu0 %v92
      %102 = vmatprep.subr.bf16.mxu0 0
      %103 = vmatpush1.bf16.msra.mxu0 %v93
      %104 = vmatprep.subr.bf16.mxu0 0
      %105 = vmatpush1.bf16.msra.mxu0 0
      %106 = vmatprep.subr.bf16.mxu0 0
      %107 = vmatpush1.bf16.msra.mxu0 0
      %108 = vmatprep.subr.bf16.mxu0 0
      %109 = vmatpush1.bf16.msra.mxu0 0
      %110 = vmatprep.subr.bf16.mxu0 0
      %111 = vmatpush1.bf16.msra.mxu0 0
      %112 = vmatprep.subr.bf16.mxu0 0
      %113 = vmatpush1.bf16.msra.mxu0 0
      %114 = vmatprep.subr.bf16.mxu0 0
      %115 = vmatpush1.bf16.msra.mxu0 0
      %116 = vmatprep.subr.bf16.mxu0 0
      %117 = vmatpush1.bf16.msra.mxu0 0
      %118 = vmatprep.subr.bf16.mxu0 0
      %119 = vmatpush1.bf16.msra.mxu0 0
      %120 = vmatprep.subr.bf16.mxu0 0
      %121 = vmatpush1.bf16.msra.mxu0 0
      %122 = vmatprep.subr.bf16.mxu0 0
      %123 = vmatpush1.bf16.msra.mxu0 0
      %124 = vmatprep.subr.bf16.mxu0 0
      %125 = vmatpush1.bf16.msra.mxu0 0
      %126 = vmatprep.subr.bf16.mxu0 0
      %127 = vmatpush1.bf16.msra.mxu0 0
      %128 = vmatprep.subr.bf16.mxu0 0
      %129 = vmatpush1.bf16.msra.mxu0 0
      %130 = vmatprep.subr.bf16.mxu0 0
      %131 = vmatpush1.bf16.msra.mxu0 0
      %132 = vmatprep.mubr.bf16.mxu0 0
      %133 = vmatmul.mubr.bf16.gmra.mrb[0].mxu0 %v98
      %v134 = vpop.f32.mrb[0].mxu0
      %v135 = vadd.f32 %v82, %v134
      %v136 = vpop.f32.mrb[0].mxu0
      %v137 = vpop.f32.mrb[0].mxu0
      %v138 = vadd.f32 %v82, %v137
      %v139 = vpop.f32.mrb[0].mxu0
      %140 = vdwg.mxu0
      %v141 = vmul.f32 %v135, 0.5
      %v142 = vmul.f32 %v138, 0.5
      %v143 = vrcp.pop 1.41421
      %v144 = vmul.f32 %v135, %v143
      %v145 = vmul.f32 %v138, %v143
      %v146 = verf.f32.pop %v144
      %v147 = verf.f32.pop %v145
      %v148 = vadd.f32 %v146, 1.0
      %v149 = vadd.f32 %v147, 1.0
      %v150 = vmul.f32 %v141, %v148
      %v151 = vmul.f32 %v142, %v149
      %v152 = vsel %vm96, %v150, 0.0
      %153 = vadd.xlane.f32.xlu0 %v152
      %v154 = vpop.xlane.xlu0 %153
      %v155 = vsel %vm96, %v151, 0.0
      %156 = vadd.xlane.f32.xlu0 %v155
      %v157 = vpop.xlane.xlu0 %156
      %v158 = vrcp.pop 32.0
      %v159 = vmul.f32 %v154, %v158
      %v160 = vmul.f32 %v157, %v158
      %v161 = vsub.f32 %v150, %v159
      %v162 = vsub.f32 %v151, %v160
      %v163 = vmul.f32 %v161, %v161
      %v164 = vmul.f32 %v162, %v162
      %v165 = vsel %vm96, %v163, 0.0
      %166 = vadd.xlane.f32.xlu0 %v165
      %v167 = vpop.xlane.xlu0 %166
      %v168 = vsel %vm96, %v164, 0.0
      %169 = vadd.xlane.f32.xlu0 %v168
      %v170 = vpop.xlane.xlu0 %169
      %v171 = vmul.f32 %v167, %v158
      %v172 = vmul.f32 %v170, %v158
      %v173 = vadd.f32 %v171, 1e-12
      %v174 = vadd.f32 %v172, 1e-12
      %v175 = vrsqrt.pop %v173
      %v176 = vrsqrt.pop %v174
      %v177 = vmul.f32 %v161, %v175
      %v178 = vmul.f32 %v162, %v176
      %v179 = vld [vmem:[%s3] sm:$0x1]
      %v181 = vlaneseq
      %v182 = vshrl.u32 %v181, 7
      %v183 = vsub.s32 0, %v182
      %v184 = vrot.slane %v179, %v183
      %v186 = vmul.f32 %v184, %v177
      %v187 = vmul.f32 %v184, %v178
      %v188 = vld [vmem:[#allocation5] sm:$0x1]
      %v190 = vlaneseq
      %v191 = vshrl.u32 %v190, 7
      %v192 = vsub.s32 0, %v191
      %v193 = vrot.slane %v188, %v192
      %v195 = vadd.f32 %v186, %v193
      %v196 = vadd.f32 %v187, %v193
      %v197 = vpack.c.bf16 %v196, %v195
      %198 = vst.msk [vmem:[#allocation2] sm:$0xff] %vm96, %v197
    $region45: #{electra_generator_prediction_heads.1} parent=1 // pred_fallthru
      _
    %v199 = vld [vmem:[#allocation2] sm:$0xff]
    %v200 = vld [vmem:[#allocation7] sm:$0xff]
    %v201 = vld [vmem:[#allocation7 + $0x8] sm:$0xff]
    %v202 = vld [vmem:[#allocation7 + $0x10] sm:$0xff]
    %v203 = vld [vmem:[#allocation7 + $0x18] sm:$0xff]
    %v204 = vld [vmem:[#allocation7 + $0x20] sm:$0xff]
    %v205 = vld [vmem:[#allocation7 + $0x28] sm:$0xff]
    %v206 = vld [vmem:[#allocation7 + $0x30] sm:$0xff]
    %v207 = vld [vmem:[#allocation7 + $0x38] sm:$0xff]
    %v208 = vld [vmem:[#allocation7 + $0x40] sm:$0xff]
    %v209 = vld [vmem:[#allocation7 + $0x48] sm:$0xff]
    %v210 = vld [vmem:[#allocation7 + $0x50] sm:$0xff]
    %v211 = vld [vmem:[#allocation7 + $0x58] sm:$0xff]
    %v212 = vld [vmem:[#allocation7 + $0x60] sm:$0xff]
    %v213 = vld [vmem:[#allocation7 + $0x68] sm:$0xff]
    %v214 = vld [vmem:[#allocation7 + $0x70] sm:$0xff]
    %v215 = vld [vmem:[#allocation7 + $0x78] sm:$0xff]
    %v216 = vld [vmem:[%s6] sm:$0xff]
    %v218 = vlaneseq
    %v219 = vshrl.u32 %v218, 7
    %v220 = vsub.s32 0, %v219
    %v221 = vrot.slane %v216, %v220
    %v222 = vlaneseq
    %v223 = vshrl.u32 %v222, 7
    %v224 = vsub.s32 1, %v223
    %v225 = vrot.slane %v216, %v224
    %v226 = vlaneseq
    %v227 = vshrl.u32 %v226, 7
    %v228 = vsub.s32 2, %v227
    %v229 = vrot.slane %v216, %v228
    %v230 = vlaneseq
    %v231 = vshrl.u32 %v230, 7
    %v232 = vsub.s32 3, %v231
    %v233 = vrot.slane %v216, %v232
    %v234 = vlaneseq
    %v235 = vshrl.u32 %v234, 7
    %v236 = vsub.s32 4, %v235
    %v237 = vrot.slane %v216, %v236
    %v238 = vlaneseq
    %v239 = vshrl.u32 %v238, 7
    %v240 = vsub.s32 5, %v239
    %v241 = vrot.slane %v216, %v240
    %v242 = vlaneseq
    %v243 = vshrl.u32 %v242, 7
    %v244 = vsub.s32 6, %v243
    %v245 = vrot.slane %v216, %v244
    %v246 = vlaneseq
    %v247 = vshrl.u32 %v246, 7
    %v248 = vsub.s32 7, %v247
    %v249 = vrot.slane %v216, %v248
    %v274 = vunpack.c.l.b16 %v200
    %v275 = vunpack.c.h.b16 %v200
    %v276 = vunpack.c.l.b16 %v201
    %v277 = vunpack.c.h.b16 %v201
    %v278 = vunpack.c.l.b16 %v202
    %v279 = vunpack.c.h.b16 %v202
    %v280 = vunpack.c.l.b16 %v203
    %v281 = vunpack.c.h.b16 %v203
    %v282 = vunpack.c.l.b16 %v204
    %v283 = vunpack.c.h.b16 %v204
    %v284 = vunpack.c.l.b16 %v205
    %v285 = vunpack.c.h.b16 %v205
    %v286 = vunpack.c.l.b16 %v206
    %v287 = vunpack.c.h.b16 %v206
    %v288 = vunpack.c.l.b16 %v207
    %v289 = vunpack.c.h.b16 %v207
    %v290 = vunpack.c.l.b16 %v208
    %v291 = vunpack.c.h.b16 %v208
    %v292 = vunpack.c.l.b16 %v209
    %v293 = vunpack.c.h.b16 %v209
    %v294 = vunpack.c.l.b16 %v210
    %v295 = vunpack.c.h.b16 %v210
    %v296 = vunpack.c.l.b16 %v211
    %v297 = vunpack.c.h.b16 %v211
    %v298 = vunpack.c.l.b16 %v212
    %v299 = vunpack.c.h.b16 %v212
    %v300 = vunpack.c.l.b16 %v213
    %v301 = vunpack.c.h.b16 %v213
    %v302 = vunpack.c.l.b16 %v214
    %v303 = vunpack.c.h.b16 %v214
    %v304 = vunpack.c.l.b16 %v215
    %v305 = vunpack.c.h.b16 %v215
    %v306 = vpack.c.b16 %v282, %v274
    %v307 = vpack.c.b16 %v283, %v275
    %v308 = vpack.c.b16 %v284, %v276
    %v309 = vpack.c.b16 %v285, %v277
    %v310 = vpack.c.b16 %v286, %v278
    %v311 = vpack.c.b16 %v287, %v279
    %v312 = vpack.c.b16 %v288, %v280
    %v313 = vpack.c.b16 %v289, %v281
    %v314 = vpack.c.b16 %v298, %v290
    %v315 = vpack.c.b16 %v299, %v291
    %v316 = vpack.c.b16 %v300, %v292
    %v317 = vpack.c.b16 %v301, %v293
    %v318 = vpack.c.b16 %v302, %v294
    %v319 = vpack.c.b16 %v303, %v295
    %v320 = vpack.c.b16 %v304, %v296
    %v321 = vpack.c.b16 %v305, %v297
    %vm338 = vcmask 261120
    %v340 = vsel %vm338, %v199, 0
    %342 = vmatprep.subr.bf16.mxu0 %v307
    %343 = vmatpush1.bf16.msra.mxu0 %v306
    %344 = vmatprep.subr.bf16.mxu0 %v315
    %345 = vmatpush1.bf16.msra.mxu0 %v314
    %346 = vmatprep.subr.bf16.mxu0 0
    %347 = vmatpush1.bf16.msra.mxu0 0
    %348 = vmatprep.subr.bf16.mxu0 0
    %349 = vmatpush1.bf16.msra.mxu0 0
    %350 = vmatprep.subr.bf16.mxu0 0
    %351 = vmatpush1.bf16.msra.mxu0 0
    %352 = vmatprep.subr.bf16.mxu0 0
    %353 = vmatpush1.bf16.msra.mxu0 0
    %354 = vmatprep.subr.bf16.mxu0 0
    %355 = vmatpush1.bf16.msra.mxu0 0
    %356 = vmatprep.subr.bf16.mxu0 0
    %357 = vmatpush1.bf16.msra.mxu0 0
    %358 = vmatprep.subr.bf16.mxu0 0
    %359 = vmatpush1.bf16.msra.mxu0 0
    %360 = vmatprep.subr.bf16.mxu0 0
    %361 = vmatpush1.bf16.msra.mxu0 0
    %362 = vmatprep.subr.bf16.mxu0 0
    %363 = vmatpush1.bf16.msra.mxu0 0
    %364 = vmatprep.subr.bf16.mxu0 0
    %365 = vmatpush1.bf16.msra.mxu0 0
    %366 = vmatprep.subr.bf16.mxu0 0
    %367 = vmatpush1.bf16.msra.mxu0 0
    %368 = vmatprep.subr.bf16.mxu0 0
    %369 = vmatpush1.bf16.msra.mxu0 0
    %370 = vmatprep.subr.bf16.mxu0 0
    %371 = vmatpush1.bf16.msra.mxu0 0
    %372 = vmatprep.subr.bf16.mxu0 0
    %373 = vmatpush1.bf16.msra.mxu0 0
    %374 = vmatprep.mubr.bf16.mxu0 0
    %375 = vmatmul.mubr.bf16.gmra.mrb[0].mxu0 %v340
    %v376 = vpop.f32.mrb[0].mxu0
    %v377 = vadd.f32 %v221, %v376
    %v378 = vpop.f32.mrb[0].mxu0
    %v379 = vadd.f32 %v225, %v378
    %v380 = vpop.f32.mrb[0].mxu0
    %v381 = vadd.f32 %v221, %v380
    %v382 = vpop.f32.mrb[0].mxu0
    %v383 = vadd.f32 %v225, %v382
    %384 = vdwg.mxu0
    %385 = vmatprep.subr.bf16.mxu0 %v309
    %386 = vmatpush1.bf16.msra.mxu0 %v308
    %387 = vmatprep.subr.bf16.mxu0 %v317
    %388 = vmatpush1.bf16.msra.mxu0 %v316
    %389 = vmatprep.subr.bf16.mxu0 0
    %390 = vmatpush1.bf16.msra.mxu0 0
    %391 = vmatprep.subr.bf16.mxu0 0
    %392 = vmatpush1.bf16.msra.mxu0 0
    %393 = vmatprep.subr.bf16.mxu0 0
    %394 = vmatpush1.bf16.msra.mxu0 0
    %395 = vmatprep.subr.bf16.mxu0 0
    %396 = vmatpush1.bf16.msra.mxu0 0
    %397 = vmatprep.subr.bf16.mxu0 0
    %398 = vmatpush1.bf16.msra.mxu0 0
    %399 = vmatprep.subr.bf16.mxu0 0
    %400 = vmatpush1.bf16.msra.mxu0 0
    %401 = vmatprep.subr.bf16.mxu0 0
    %402 = vmatpush1.bf16.msra.mxu0 0
    %403 = vmatprep.subr.bf16.mxu0 0
    %404 = vmatpush1.bf16.msra.mxu0 0
    %405 = vmatprep.subr.bf16.mxu0 0
    %406 = vmatpush1.bf16.msra.mxu0 0
    %407 = vmatprep.subr.bf16.mxu0 0
    %408 = vmatpush1.bf16.msra.mxu0 0
    %409 = vmatprep.subr.bf16.mxu0 0
    %410 = vmatpush1.bf16.msra.mxu0 0
    %411 = vmatprep.subr.bf16.mxu0 0
    %412 = vmatpush1.bf16.msra.mxu0 0
    %413 = vmatprep.subr.bf16.mxu0 0
    %414 = vmatpush1.bf16.msra.mxu0 0
    %415 = vmatprep.subr.bf16.mxu0 0
    %416 = vmatpush1.bf16.msra.mxu0 0
    %417 = vmatprep.mubr.bf16.mxu0 0
    %418 = vmatmul.mubr.bf16.gmra.mrb[0].mxu0 %v340
    %v419 = vpop.f32.mrb[0].mxu0
    %v420 = vadd.f32 %v229, %v419
    %v421 = vpop.f32.mrb[0].mxu0
    %v422 = vadd.f32 %v233, %v421
    %v423 = vpop.f32.mrb[0].mxu0
    %v424 = vadd.f32 %v229, %v423
    %v425 = vpop.f32.mrb[0].mxu0
    %v426 = vadd.f32 %v233, %v425
    %427 = vdwg.mxu0
    %428 = vmatprep.subr.bf16.mxu0 %v311
    %429 = vmatpush1.bf16.msra.mxu0 %v310
    %430 = vmatprep.subr.bf16.mxu0 %v319
    %431 = vmatpush1.bf16.msra.mxu0 %v318
    %432 = vmatprep.subr.bf16.mxu0 0
    %433 = vmatpush1.bf16.msra.mxu0 0
    %434 = vmatprep.subr.bf16.mxu0 0
    %435 = vmatpush1.bf16.msra.mxu0 0
    %436 = vmatprep.subr.bf16.mxu0 0
    %437 = vmatpush1.bf16.msra.mxu0 0
    %438 = vmatprep.subr.bf16.mxu0 0
    %439 = vmatpush1.bf16.msra.mxu0 0
    %440 = vmatprep.subr.bf16.mxu0 0
    %441 = vmatpush1.bf16.msra.mxu0 0
    %442 = vmatprep.subr.bf16.mxu0 0
    %443 = vmatpush1.bf16.msra.mxu0 0
    %444 = vmatprep.subr.bf16.mxu0 0
    %445 = vmatpush1.bf16.msra.mxu0 0
    %446 = vmatprep.subr.bf16.mxu0 0
    %447 = vmatpush1.bf16.msra.mxu0 0
    %448 = vmatprep.subr.bf16.mxu0 0
    %449 = vmatpush1.bf16.msra.mxu0 0
    %450 = vmatprep.subr.bf16.mxu0 0
    %451 = vmatpush1.bf16.msra.mxu0 0
    %452 = vmatprep.subr.bf16.mxu0 0
    %453 = vmatpush1.bf16.msra.mxu0 0
    %454 = vmatprep.subr.bf16.mxu0 0
    %455 = vmatpush1.bf16.msra.mxu0 0
    %456 = vmatprep.subr.bf16.mxu0 0
    %457 = vmatpush1.bf16.msra.mxu0 0
    %458 = vmatprep.subr.bf16.mxu0 0
    %459 = vmatpush1.bf16.msra.mxu0 0
    %460 = vmatprep.mubr.bf16.mxu0 0
    %461 = vmatmul.mubr.bf16.gmra.mrb[0].mxu0 %v340
    %v462 = vpop.f32.mrb[0].mxu0
    %v463 = vadd.f32 %v237, %v462
    %v464 = vpop.f32.mrb[0].mxu0
    %v465 = vadd.f32 %v241, %v464
    %v466 = vpop.f32.mrb[0].mxu0
    %v467 = vadd.f32 %v237, %v466
    %v468 = vpop.f32.mrb[0].mxu0
    %v469 = vadd.f32 %v241, %v468
    %470 = vdwg.mxu0
    %471 = vmatprep.subr.bf16.mxu0 %v313
    %472 = vmatpush1.bf16.msra.mxu0 %v312
    %473 = vmatprep.subr.bf16.mxu0 %v321
    %474 = vmatpush1.bf16.msra.mxu0 %v320
    %475 = vmatprep.subr.bf16.mxu0 0
    %476 = vmatpush1.bf16.msra.mxu0 0
    %477 = vmatprep.subr.bf16.mxu0 0
    %478 = vmatpush1.bf16.msra.mxu0 0
    %479 = vmatprep.subr.bf16.mxu0 0
    %480 = vmatpush1.bf16.msra.mxu0 0
    %481 = vmatprep.subr.bf16.mxu0 0
    %482 = vmatpush1.bf16.msra.mxu0 0
    %483 = vmatprep.subr.bf16.mxu0 0
    %484 = vmatpush1.bf16.msra.mxu0 0
    %485 = vmatprep.subr.bf16.mxu0 0
    %486 = vmatpush1.bf16.msra.mxu0 0
    %487 = vmatprep.subr.bf16.mxu0 0
    %488 = vmatpush1.bf16.msra.mxu0 0
    %489 = vmatprep.subr.bf16.mxu0 0
    %490 = vmatpush1.bf16.msra.mxu0 0
    %491 = vmatprep.subr.bf16.mxu0 0
    %492 = vmatpush1.bf16.msra.mxu0 0
    %493 = vmatprep.subr.bf16.mxu0 0
    %494 = vmatpush1.bf16.msra.mxu0 0
    %495 = vmatprep.subr.bf16.mxu0 0
    %496 = vmatpush1.bf16.msra.mxu0 0
    %497 = vmatprep.subr.bf16.mxu0 0
    %498 = vmatpush1.bf16.msra.mxu0 0
    %499 = vmatprep.subr.bf16.mxu0 0
    %500 = vmatpush1.bf16.msra.mxu0 0
    %501 = vmatprep.subr.bf16.mxu0 0
    %502 = vmatpush1.bf16.msra.mxu0 0
    %503 = vmatprep.mubr.bf16.mxu0 0
    %504 = vmatmul.mubr.bf16.gmra.mrb[0].mxu0 %v340
    %v505 = vpop.f32.mrb[0].mxu0
    %v506 = vadd.f32 %v245, %v505
    %v507 = vpop.f32.mrb[0].mxu0
    %v508 = vadd.f32 %v249, %v507
    %v509 = vpop.f32.mrb[0].mxu0
    %v510 = vadd.f32 %v245, %v509
    %v511 = vpop.f32.mrb[0].mxu0
    %v512 = vadd.f32 %v249, %v511
    %513 = vdwg.mxu0
    %514 = vst [vmem:[%s7] sm:$0xff] %v377
    %515 = vst [vmem:[%s7 + $0x8] sm:$0xff] %v379
    %516 = vst [vmem:[%s7 + $0x10] sm:$0xff] %v420
    %517 = vst [vmem:[%s7 + $0x18] sm:$0xff] %v422
    %518 = vst [vmem:[%s7 + $0x20] sm:$0xff] %v463
    %519 = vst [vmem:[%s7 + $0x28] sm:$0xff] %v465
    %520 = vst [vmem:[%s7 + $0x30] sm:$0xff] %v506
    %521 = vst [vmem:[%s7 + $0x38] sm:$0xff] %v508
    %522 = vst [vmem:[%s7 + $0x40] sm:$0xff] %v381
    %523 = vst [vmem:[%s7 + $0x48] sm:$0xff] %v383
    %524 = vst [vmem:[%s7 + $0x50] sm:$0xff] %v424
    %525 = vst [vmem:[%s7 + $0x58] sm:$0xff] %v426
    %526 = vst [vmem:[%s7 + $0x60] sm:$0xff] %v467
    %527 = vst [vmem:[%s7 + $0x68] sm:$0xff] %v469
    %528 = vst [vmem:[%s7 + $0x70] sm:$0xff] %v510
    %529 = vst [vmem:[%s7 + $0x78] sm:$0xff] %v512
    // Predicated region
    $region46: #{electra_generator_prediction_heads.1} parent=1 // pred_check
      _
    $region47: #{electra_generator_prediction_heads.1} parent=1 // pred_check_branch
      %531 = sbr.rel (0) target = $region49
    $region48: #{electra_generator_prediction_heads.1} parent=1 // pred_region
      _
    $region49: #{electra_generator_prediction_heads.1} parent=1 // pred_fallthru
      _
    // Predicated region
    $region50: #{electra_generator_prediction_heads.1} parent=1 // pred_check
      _
    $region51: #{electra_generator_prediction_heads.1} parent=1 // pred_check_branch
      %533 = sbr.rel (0) target = $region53
    $region52: #{electra_generator_prediction_heads.1} parent=1 // pred_region
      _
    $region53: #{electra_generator_prediction_heads.1} parent=1 // pred_fallthru
      _
    %534 = vsyncpa [#allocation4], 1
    %535 = vsyncpa [#allocation6], 1

</llo_original>
